<compile_context>
chip_gen: v7x
topology: tpu7x:2x2x1
jax: 0.10.0
libtpu: 0.0.40
codegen_flags: <defaults>
</compile_context>

<pallas_src>
import jax
import jax.numpy as jnp
from jax.experimental import pallas as pl
from jax.experimental.pallas import tpu as pltpu

STATE_DIM = 6       # Acrobot-v1 observation dim
ACTION_DIM = 3      # Acrobot-v1 action dim
HIDDEN_DIM = 128
_CHUNK = 128        # in-kernel sub-chunk of the batch tile (rows kept in vregs)
_W2_PAD = 128       # MXU-friendly padded width of the output layer (in-kernel only)


def _round_up(x, m):
    return (x + m - 1) // m * m


def _pick_tile(batch, block_b):
    """Batch tile: single 8-aligned tile for tiny batches, else a multiple of
    _CHUNK aiming for >= 4 grid steps (>= 2 per TensorCore on v7x)."""
    b8 = _round_up(batch, 8)
    if b8 <= _CHUNK:
        return b8
    block_b = max(_CHUNK, block_b // _CHUNK * _CHUNK)
    target = _round_up(max(_CHUNK, pl.cdiv(batch, 4)), _CHUNK)
    return min(target, block_b)


def _make_qnet_kernel(tb, chunk):
    n_chunks = tb // chunk

    def kernel(x_ref, w1_ref, b1_ref, w2_ref, b2_ref, out_ref):
        # Weights/biases are VMEM-resident across the whole grid (constant
        # index_maps); load once per tile.
        w1 = w1_ref[...]    # (6, 128)   bf16
        b1 = b1_ref[...]    # (1, 128)   f32
        w2 = w2_ref[...]    # (128, 128) bf16, columns >= ACTION_DIM are zero
        b2 = b2_ref[...]    # (1, 3)     f32

        def compute(row):
            # Cast x to bf16 in-kernel (no separate convert pass in HBM).
            xb = x_ref[pl.ds(row, chunk), :].astype(jnp.bfloat16)        # (chunk, 6)
            h = jnp.dot(xb, w1, preferred_element_type=jnp.float32)      # MXU, f32 acc
            h = jnp.maximum(h + b1, 0.0).astype(jnp.bfloat16)            # VPU, stays in vregs
            o = jnp.dot(h, w2, preferred_element_type=jnp.float32)       # (chunk, 128) f32
            # Only the 3 real Q-value columns hit HBM.
            out_ref[pl.ds(row, chunk), :] = o[:, :ACTION_DIM] + b2

        if n_chunks == 1:
            compute(0)
        else:
            def body(c, carry):
                compute(c * chunk)
                return carry
            jax.lax.fori_loop(0, n_chunks, body, 0, unroll=True)

    return kernel


def prepare_qnet_params(w1, b1, w2, b2):
    """One-time weight prep (do at init / target-network sync, NOT per forward):
    bf16 MXU operands, 2-D biases, w2 zero-padded to 128 columns."""
    w1b = jnp.asarray(w1, jnp.float32).astype(jnp.bfloat16)                    # (6, 128)
    b1r = jnp.asarray(b1, jnp.float32).reshape(1, HIDDEN_DIM)                  # (1, 128)
    w2p = jnp.zeros((HIDDEN_DIM, _W2_PAD), jnp.float32).at[:, :ACTION_DIM].set(
        jnp.asarray(w2, jnp.float32))
    w2b = w2p.astype(jnp.bfloat16)                                             # (128, 128)
    b2r = jnp.asarray(b2, jnp.float32).reshape(1, ACTION_DIM)                  # (1, 3)
    return w1b, b1r, w2b, b2r


def qnet_forward(x, params, *, block_b=512):
    """x: (B, 6) f32, params from prepare_qnet_params.
    Returns (B, 3) f32 Q-values == relu(x @ w1 + b1) @ w2 + b2."""
    w1b, b1, w2b, b2 = params
    B = x.shape[0]

    tb = _pick_tile(B, block_b)
    bp = _round_up(B, tb)
    xp = x if bp == B else jnp.pad(x, ((0, bp - B), (0, 0)))
    chunk = min(_CHUNK, tb)

    out = pl.pallas_call(
        _make_qnet_kernel(tb, chunk),
        out_shape=jax.ShapeDtypeStruct((bp, ACTION_DIM), jnp.float32),
        grid=(bp // tb,),
        in_specs=[
            pl.BlockSpec((tb, STATE_DIM), lambda i: (i, 0)),            # x: streamed per tile
            pl.BlockSpec((STATE_DIM, HIDDEN_DIM), lambda i: (0, 0)),    # w1: VMEM-resident
            pl.BlockSpec((1, HIDDEN_DIM), lambda i: (0, 0)),            # b1: VMEM-resident
            pl.BlockSpec((HIDDEN_DIM, _W2_PAD), lambda i: (0, 0)),      # w2: VMEM-resident
            pl.BlockSpec((1, ACTION_DIM), lambda i: (0, 0)),            # b2: VMEM-resident
        ],
        out_specs=pl.BlockSpec((tb, ACTION_DIM), lambda i: (i, 0)),
        compiler_params=pltpu.CompilerParams(
            dimension_semantics=("parallel",),   # shard batch tiles across TCs (v7x)
        ),
    )(xp, w1b, b1, w2b, b2)

    # TODO(synk): for the B<=8 env-loop path, fuse argmax / epsilon-greedy action
    # selection into the kernel (emit (B,) int32 actions) to drop the remaining
    # per-step launch overhead; note padded batch rows must be masked there.
    return out if bp == B else out[:B]


def init_params(key):
    """Deterministic init mimicking torch.nn.Linear default (U[-1/sqrt(fan_in), +])."""
    k1, k2, k3, k4 = jax.random.split(key, 4)
    bound1 = 1.0 / jnp.sqrt(jnp.float32(STATE_DIM))
    bound2 = 1.0 / jnp.sqrt(jnp.float32(HIDDEN_DIM))
    w1 = jax.random.uniform(k1, (STATE_DIM, HIDDEN_DIM), jnp.float32, -bound1, bound1)
    b1 = jax.random.uniform(k2, (HIDDEN_DIM,), jnp.float32, -bound1, bound1)
    w2 = jax.random.uniform(k3, (HIDDEN_DIM, ACTION_DIM), jnp.float32, -bound2, bound2)
    b2 = jax.random.uniform(k4, (ACTION_DIM,), jnp.float32, -bound2, bound2)
    return w1, b1, w2, b2


def reference_forward_bf16(x, w1, b1, w2, b2):
    """Same numerics as the kernel (bf16 MXU operands, f32 accumulate)."""
    xb = x.astype(jnp.bfloat16)
    h = jnp.dot(xb, w1.astype(jnp.bfloat16), preferred_element_type=jnp.float32) + b1
    h = jnp.maximum(h, 0.0).astype(jnp.bfloat16)
    return jnp.dot(h, w2.astype(jnp.bfloat16), preferred_element_type=jnp.float32) + b2


def reference_forward_f32(x, w1, b1, w2, b2):
    h = jnp.maximum(x @ w1 + b1, 0.0)
    return h @ w2 + b2


if __name__ == "__main__":
    key = jax.random.PRNGKey(0)
    kx, kp = jax.random.split(key)
    w1, b1, w2, b2 = init_params(kp)
    params = prepare_qnet_params(w1, b1, w2, b2)   # one-time prep, reused across calls

    # Env-loop style tiny batch (single 8-row tile, grid of 1).
    x_small = jax.random.normal(kx, (8, STATE_DIM), jnp.float32)
    out_small = jax.block_until_ready(qnet_forward(x_small, params))
    assert out_small.shape == (8, ACTION_DIM)
    assert jnp.allclose(out_small, reference_forward_bf16(x_small, w1, b1, w2, b2),
                        atol=1e-2, rtol=1e-2), "mismatch vs bf16 reference (small)"
    assert jnp.allclose(out_small, reference_forward_f32(x_small, w1, b1, w2, b2),
                        atol=5e-2, rtol=5e-2), "mismatch vs f32 reference (small)"

    # Replay-buffer style batch: exercises tb=256 tiling (grid=3), row padding,
    # and the in-kernel 128-row sub-chunk loop.
    x_big = jax.random.normal(kx, (600, STATE_DIM), jnp.float32)
    out_big = jax.block_until_ready(qnet_forward(x_big, params))
    assert out_big.shape == (600, ACTION_DIM)
    assert jnp.allclose(out_big, reference_forward_bf16(x_big, w1, b1, w2, b2),
                        atol=1e-2, rtol=1e-2), "mismatch vs bf16 reference (big)"

    print("KERNEL_OK")
</pallas_src>

<mosaic_0001>
module attributes {stable_mosaic.version = 11 : i64} {
  func.func @kernel(%arg0: i32, %arg1: memref<8x6xf32, #tpu.memory_space<vmem>>, %arg2: memref<6x128xbf16, #tpu.memory_space<vmem>>, %arg3: memref<1x128xf32, #tpu.memory_space<vmem>>, %arg4: memref<128x128xbf16, #tpu.memory_space<vmem>>, %arg5: memref<1x3xf32, #tpu.memory_space<vmem>>, %arg6: memref<8x3xf32, #tpu.memory_space<vmem>>) attributes {dimension_semantics = [#tpu.dimension_semantics<parallel>], iteration_bounds = array<i64: 1>, scalar_prefetch = 0 : i64, scratch_operands = 0 : i64, tpu.core_type = #tpu.core_type<tc>, window_params = [{transform_indices = @transform_0, window_bounds = array<i64: 8, 6>}, {pipeline_mode = #tpu.pipeline_mode<synchronous>, transform_indices = @transform_1, window_bounds = array<i64: 6, 128>}, {pipeline_mode = #tpu.pipeline_mode<synchronous>, transform_indices = @transform_2, window_bounds = array<i64: 1, 128>}, {pipeline_mode = #tpu.pipeline_mode<synchronous>, transform_indices = @transform_3, window_bounds = array<i64: 128, 128>}, {pipeline_mode = #tpu.pipeline_mode<synchronous>, transform_indices = @transform_4, window_bounds = array<i64: 1, 3>}, {transform_indices = @transform_5, window_bounds = array<i64: 8, 3>}]} {
    %c0 = arith.constant 0 : index
    %c0_0 = arith.constant 0 : index
    %0 = vector.load %arg2[%c0, %c0_0] : memref<6x128xbf16, #tpu.memory_space<vmem>>, vector<6x128xbf16>
    %c0_1 = arith.constant 0 : index
    %c0_2 = arith.constant 0 : index
    %1 = vector.load %arg3[%c0_1, %c0_2] : memref<1x128xf32, #tpu.memory_space<vmem>>, vector<1x128xf32>
    %c0_3 = arith.constant 0 : index
    %c0_4 = arith.constant 0 : index
    %2 = vector.load %arg4[%c0_3, %c0_4] : memref<128x128xbf16, #tpu.memory_space<vmem>>, vector<128x128xbf16>
    %c0_5 = arith.constant 0 : index
    %c0_6 = arith.constant 0 : index
    %3 = vector.load %arg5[%c0_5, %c0_6] : memref<1x3xf32, #tpu.memory_space<vmem>>, vector<1x3xf32>
    %c0_7 = arith.constant 0 : index
    %c0_8 = arith.constant 0 : index
    %4 = vector.load %arg1[%c0_7, %c0_8] : memref<8x6xf32, #tpu.memory_space<vmem>>, vector<8x6xf32>
    %5 = arith.truncf %4 : vector<8x6xf32> to vector<8x6xbf16>
    %cst = arith.constant dense<0.000000e+00> : vector<8x128xf32>
    %6 = tpu.matmul %5, %0, %cst {dimension_numbers = #tpu.dot_dimension_numbers<[1], [0], [0], [1], [0, 0, 1, 1], [], []>} : vector<8x6xbf16>, vector<6x128xbf16>, vector<8x128xf32> -> vector<8x128xf32>
    %7 = vector.broadcast %1 : vector<1x128xf32> to vector<8x128xf32>
    %8 = arith.addf %6, %7 : vector<8x128xf32>
    %cst_9 = arith.constant 0.000000e+00 : f32
    %9 = vector.broadcast %cst_9 : f32 to vector<8x128xf32>
    %10 = arith.maximumf %8, %9 : vector<8x128xf32>
    %11 = arith.truncf %10 : vector<8x128xf32> to vector<8x128xbf16>
    %cst_10 = arith.constant dense<0.000000e+00> : vector<8x128xf32>
    %12 = tpu.matmul %11, %2, %cst_10 {dimension_numbers = #tpu.dot_dimension_numbers<[1], [0], [0], [1], [0, 0, 1, 1], [], []>} : vector<8x128xbf16>, vector<128x128xbf16>, vector<8x128xf32> -> vector<8x128xf32>
    %13 = vector.extract_strided_slice %12 {offsets = [0, 0], sizes = [8, 3], strides = [1, 1]} : vector<8x128xf32> to vector<8x3xf32>
    %14 = vector.broadcast %3 : vector<1x3xf32> to vector<8x3xf32>
    %15 = arith.addf %13, %14 : vector<8x3xf32>
    %c0_11 = arith.constant 0 : index
    %c0_12 = arith.constant 0 : index
    %16 = vector.load %arg6[%c0_11, %c0_12] : memref<8x3xf32, #tpu.memory_space<vmem>>, vector<8x3xf32>
    tpu.vector_store %arg6[%c0_11, %c0_12], %15 {strides = array<i32>} : memref<8x3xf32, #tpu.memory_space<vmem>>, vector<8x3xf32>,
    return
  }
  func.func @transform_0(%arg0: i32) -> (i32, i32) {
    %c0_i32 = arith.constant 0 : i32
    %c0_i32_0 = arith.constant 0 : i32
    return %arg0, %c0_i32 : i32, i32
  }
  func.func @transform_1(%arg0: i32) -> (i32, i32) {
    %c0_i32 = arith.constant 0 : i32
    %c0_i32_0 = arith.constant 0 : i32
    %c0_i32_1 = arith.constant 0 : i32
    return %c0_i32, %c0_i32_0 : i32, i32
  }
  func.func @transform_2(%arg0: i32) -> (i32, i32) {
    %c0_i32 = arith.constant 0 : i32
    %c0_i32_0 = arith.constant 0 : i32
    %c0_i32_1 = arith.constant 0 : i32
    return %c0_i32, %c0_i32_0 : i32, i32
  }
  func.func @transform_3(%arg0: i32) -> (i32, i32) {
    %c0_i32 = arith.constant 0 : i32
    %c0_i32_0 = arith.constant 0 : i32
    %c0_i32_1 = arith.constant 0 : i32
    return %c0_i32, %c0_i32_0 : i32, i32
  }
  func.func @transform_4(%arg0: i32) -> (i32, i32) {
    %c0_i32 = arith.constant 0 : i32
    %c0_i32_0 = arith.constant 0 : i32
    %c0_i32_1 = arith.constant 0 : i32
    return %c0_i32, %c0_i32_0 : i32, i32
  }
  func.func @transform_5(%arg0: i32) -> (i32, i32) {
    %c0_i32 = arith.constant 0 : i32
    %c0_i32_0 = arith.constant 0 : i32
    return %arg0, %c0_i32 : i32, i32
  }
}

</mosaic_0001>

<llo_original>
// kernel: tpu_custom_call.1
$region0: #{tpu_custom_call.1}
  #allocation0 [shape = 'u32[]', space=smem, size = 0x4, offset = 0x4, fixed_abs, tag = 'smem constant byte address 0x4 - core index']
  #allocation1 [shape = 'u32[144,128]{1,0:T(1,128)}', space=vmem, size = 0x12000, scoped, tag = 'internal scratch']
  %s0 = inlined_call_operand.hbm [shape: f32[8,6], index: 0, kind: input, shape index: {}]
  %s1 = inlined_call_operand.hbm [shape: bf16[6,128], index: 1, kind: input, shape index: {}]
  %s2 = inlined_call_operand.vmem [shape: f32[1,128], index: 2, kind: input, shape index: {}]
  %s3 = inlined_call_operand.hbm [shape: bf16[128,128], index: 3, kind: input, shape index: {}]
  %s4 = inlined_call_operand.vmem [shape: f32[1,3], index: 4, kind: input, shape index: {}]
  %s5 = inlined_call_operand.vmem [shape: f32[8,3], index: 5, kind: output, shape index: {}]
  %s6 = sld [smem:[#allocation0]]
  $region42: #{tpu_custom_call.1} parent=0
    _
  %s8 = ssub.s32 1, %s6
  %s9 = scalar_select 0, %s8, %s6
  $region1: #{tpu_custom_call.1} parent=0
    #allocation2 [shape = 'u8[4096]{0}', space=vmem, size = 0x1000, scoped, tag = 'input window, operand 0, single buffered']
    #allocation3 [shape = 's32[1]{0}', space=sflag, size = 0x4, scoped, tag = 'scoped memory for tpu_custom_call.1']
    #allocation4 [shape = 'u8[2048]{0}', space=vmem, size = 0x800, scoped, tag = 'input window, operand 1, single buffered']
    #allocation5 [shape = 's32[1]{0}', space=sflag, size = 0x4, scoped, tag = 'scoped memory for tpu_custom_call.1']
    #allocation6 [shape = 'u8[32768]{0}', space=vmem, size = 0x8000, scoped, tag = 'input window, operand 3, single buffered']
    %10 = vsyncpa [#allocation3], 0
    %11 = vsyncpa [#allocation5], 0
    // Predicated region
    $region2: #{tpu_custom_call.1} parent=1 // pred_check
      _
    $region3: #{tpu_custom_call.1} parent=1 // pred_check_branch
      %13 = sbr.rel (0) target = $region5
    $region4: #{tpu_custom_call.1} parent=1 // pred_region
      %s15 = ssub.s32 128, 128
      %16 = vsyncadd [#allocation3], %s15
      %s18 = sshll.u32 [#allocation2], 4
      %s19 = int_to_ptr.vmem [resolvable:$true] %s18
      %21 = dma.hbm_to_vmem [thread:$0]  %s0, 128, %s19, [#allocation3]
    $region5: #{tpu_custom_call.1} parent=1 // pred_fallthru
      _
    // Predicated region
    $region6: #{tpu_custom_call.1} parent=1 // pred_check
      _
    $region7: #{tpu_custom_call.1} parent=1 // pred_check_branch
      %23 = sbr.rel (0) target = $region9
    $region8: #{tpu_custom_call.1} parent=1 // pred_region
      %s25 = ssub.s32 64, 64
      %26 = vsyncadd [#allocation5], %s25
      %s28 = sshll.u32 [#allocation4], 4
      %s29 = int_to_ptr.vmem [resolvable:$true] %s28
      %31 = dma.hbm_to_vmem [thread:$0]  %s1, 64, %s29, [#allocation5]
    $region9: #{tpu_custom_call.1} parent=1 // pred_fallthru
      _
    // Predicated region
    $region10: #{tpu_custom_call.1} parent=1 // pred_check
      _
    $region11: #{tpu_custom_call.1} parent=1 // pred_check_branch
      %33 = sbr.rel (0) target = $region13
    $region12: #{tpu_custom_call.1} parent=1 // pred_region
      _
    $region13: #{tpu_custom_call.1} parent=1 // pred_fallthru
      _
    // Predicated region
    $region14: #{tpu_custom_call.1} parent=1 // pred_check
      _
    $region15: #{tpu_custom_call.1} parent=1 // pred_check_branch
      %35 = sbr.rel (0) target = $region17
    $region16: #{tpu_custom_call.1} parent=1 // pred_region
      %s37 = ssub.s32 1024, 1024
      %38 = vsyncadd [#allocation5], %s37
      %s39 = sshll.u32 [#allocation6], 4
      %s40 = int_to_ptr.vmem [resolvable:$true] %s39
      %45 = dma.hbm_to_vmem [thread:$0]  %s3, 1024, %s40, [#allocation5], 64, 64, 4
    $region17: #{tpu_custom_call.1} parent=1 // pred_fallthru
      _
    // Predicated region
    $region18: #{tpu_custom_call.1} parent=1 // pred_check
      _
    $region19: #{tpu_custom_call.1} parent=1 // pred_check_branch
      %47 = sbr.rel (0) target = $region21
    $region20: #{tpu_custom_call.1} parent=1 // pred_region
      _
    $region21: #{tpu_custom_call.1} parent=1 // pred_fallthru
      _
    // Predicated region
    $region22: #{tpu_custom_call.1} parent=1 // pred_check
      _
    $region23: #{tpu_custom_call.1} parent=1 // pred_check_branch
      %49 = sbr.rel (0) target = $region25
    $region24: #{tpu_custom_call.1} parent=1 // pred_region
      %50 = dma.done [#allocation3], 128
    $region25: #{tpu_custom_call.1} parent=1 // pred_fallthru
      _
    // Predicated region
    $region26: #{tpu_custom_call.1} parent=1 // pred_check
      _
    $region27: #{tpu_custom_call.1} parent=1 // pred_check_branch
      %52 = sbr.rel (0) target = $region29
    $region28: #{tpu_custom_call.1} parent=1 // pred_region
      %53 = dma.done [#allocation5], 64
    $region29: #{tpu_custom_call.1} parent=1 // pred_fallthru
      _
    // Predicated region
    $region30: #{tpu_custom_call.1} parent=1 // pred_check
      _
    $region31: #{tpu_custom_call.1} parent=1 // pred_check_branch
      %55 = sbr.rel (0) target = $region33
    $region32: #{tpu_custom_call.1} parent=1 // pred_region
      %56 = dma.done [#allocation5], 1024
    $region33: #{tpu_custom_call.1} parent=1 // pred_fallthru
      _
    %v58 = vld [vmem:[#allocation4] sm:$0x7]
    %v59 = vld [vmem:[%s2] sm:$0x1]
    %v60 = vld [vmem:[#allocation6] sm:$0xf]
    %v61 = vld [vmem:[#allocation6 + $0x4] sm:$0xf]
    %v62 = vld [vmem:[#allocation6 + $0x8] sm:$0xf]
    %v63 = vld [vmem:[#allocation6 + $0xc] sm:$0xf]
    %v64 = vld [vmem:[#allocation6 + $0x10] sm:$0xf]
    %v65 = vld [vmem:[#allocation6 + $0x14] sm:$0xf]
    %v66 = vld [vmem:[#allocation6 + $0x18] sm:$0xf]
    %v67 = vld [vmem:[#allocation6 + $0x1c] sm:$0xf]
    %v68 = vld [vmem:[#allocation6 + $0x20] sm:$0xf]
    %v69 = vld [vmem:[#allocation6 + $0x24] sm:$0xf]
    %v70 = vld [vmem:[#allocation6 + $0x28] sm:$0xf]
    %v71 = vld [vmem:[#allocation6 + $0x2c] sm:$0xf]
    %v72 = vld [vmem:[#allocation6 + $0x30] sm:$0xf]
    %v73 = vld [vmem:[#allocation6 + $0x34] sm:$0xf]
    %v74 = vld [vmem:[#allocation6 + $0x38] sm:$0xf]
    %v75 = vld [vmem:[#allocation6 + $0x3c] sm:$0xf]
    %v76 = vld [vmem:[%s4] sm:$0x1]
    %v77 = vld [vmem:[#allocation2] sm:$0xff]
    %v78 = vpack.c.bf16 %v77, %v77
    %v80 = vlaneseq
    %v81 = vshrl.u32 %v80, 7
    %v82 = vsub.s32 0, %v81
    %v83 = vrot.slane %v59, %v82
    %vm85 = vcmask 48128
    %v87 = vsel %vm85, %v78, 0
    %vm89 = vcmask 1042432
    %v91 = vsel %vm89, %v58, 0
    %93 = vmatprep.subr.bf16.mxu0 0
    %94 = vmatpush1.bf16.msra.mxu0 %v91
    %95 = vmatprep.subr.bf16.mxu0 0
    %96 = vmatpush1.bf16.msra.mxu0 0
    %97 = vmatprep.subr.bf16.mxu0 0
    %98 = vmatpush1.bf16.msra.mxu0 0
    %99 = vmatprep.subr.bf16.mxu0 0
    %100 = vmatpush1.bf16.msra.mxu0 0
    %101 = vmatprep.subr.bf16.mxu0 0
    %102 = vmatpush1.bf16.msra.mxu0 0
    %103 = vmatprep.subr.bf16.mxu0 0
    %104 = vmatpush1.bf16.msra.mxu0 0
    %105 = vmatprep.subr.bf16.mxu0 0
    %106 = vmatpush1.bf16.msra.mxu0 0
    %107 = vmatprep.subr.bf16.mxu0 0
    %108 = vmatpush1.bf16.msra.mxu0 0
    %109 = vmatprep.subr.bf16.mxu0 0
    %110 = vmatpush1.bf16.msra.mxu0 0
    %111 = vmatprep.subr.bf16.mxu0 0
    %112 = vmatpush1.bf16.msra.mxu0 0
    %113 = vmatprep.subr.bf16.mxu0 0
    %114 = vmatpush1.bf16.msra.mxu0 0
    %115 = vmatprep.subr.bf16.mxu0 0
    %116 = vmatpush1.bf16.msra.mxu0 0
    %117 = vmatprep.subr.bf16.mxu0 0
    %118 = vmatpush1.bf16.msra.mxu0 0
    %119 = vmatprep.subr.bf16.mxu0 0
    %120 = vmatpush1.bf16.msra.mxu0 0
    %121 = vmatprep.subr.bf16.mxu0 0
    %122 = vmatpush1.bf16.msra.mxu0 0
    %123 = vmatprep.subr.bf16.mxu0 0
    %124 = vmatpush1.bf16.msra.mxu0 0
    %125 = vmatprep.mubr.bf16.mxu0 0
    %126 = vmatmul.mubr.bf16.gmra.mrb[0].mxu0 %v87
    %v127 = vpop.f32.mrb[0].mxu0
    %v128 = vadd.f32 %v83, %v127
    %v129 = vpop.f32.mrb[0].mxu0
    %v130 = vpop.f32.mrb[0].mxu0
    %v131 = vpop.f32.mrb[0].mxu0
    %132 = vdwg.mxu0
    %v133 = vmax.f32 %v128, 0.0
    %v134 = vpack.c.bf16 %v133, %v133
    %v151 = vunpack.c.l.b16 %v60
    %v152 = vunpack.c.l.b16 %v61
    %v153 = vunpack.c.l.b16 %v62
    %v154 = vunpack.c.l.b16 %v63
    %v155 = vunpack.c.l.b16 %v64
    %v156 = vunpack.c.l.b16 %v65
    %v157 = vunpack.c.l.b16 %v66
    %v158 = vunpack.c.l.b16 %v67
    %v159 = vunpack.c.l.b16 %v68
    %v160 = vunpack.c.l.b16 %v69
    %v161 = vunpack.c.l.b16 %v70
    %v162 = vunpack.c.l.b16 %v71
    %v163 = vunpack.c.l.b16 %v72
    %v164 = vunpack.c.l.b16 %v73
    %v165 = vunpack.c.l.b16 %v74
    %v166 = vunpack.c.l.b16 %v75
    %v167 = vpack.c.b16 %v152, %v151
    %v168 = vpack.c.b16 %v154, %v153
    %v169 = vpack.c.b16 %v156, %v155
    %v170 = vpack.c.b16 %v158, %v157
    %v171 = vpack.c.b16 %v160, %v159
    %v172 = vpack.c.b16 %v162, %v161
    %v173 = vpack.c.b16 %v164, %v163
    %v174 = vpack.c.b16 %v166, %v165
    %183 = vmatprep.subr.bf16.mxu0 0
    %184 = vmatpush1.bf16.msra.mxu0 %v167
    %185 = vmatprep.subr.bf16.mxu0 0
    %186 = vmatpush1.bf16.msra.mxu0 %v168
    %187 = vmatprep.subr.bf16.mxu0 0
    %188 = vmatpush1.bf16.msra.mxu0 %v169
    %189 = vmatprep.subr.bf16.mxu0 0
    %190 = vmatpush1.bf16.msra.mxu0 %v170
    %191 = vmatprep.subr.bf16.mxu0 0
    %192 = vmatpush1.bf16.msra.mxu0 %v171
    %193 = vmatprep.subr.bf16.mxu0 0
    %194 = vmatpush1.bf16.msra.mxu0 %v172
    %195 = vmatprep.subr.bf16.mxu0 0
    %196 = vmatpush1.bf16.msra.mxu0 %v173
    %197 = vmatprep.subr.bf16.mxu0 0
    %198 = vmatpush1.bf16.msra.mxu0 %v174
    %199 = vmatprep.subr.bf16.mxu0 0
    %200 = vmatpush1.bf16.msra.mxu0 0
    %201 = vmatprep.subr.bf16.mxu0 0
    %202 = vmatpush1.bf16.msra.mxu0 0
    %203 = vmatprep.subr.bf16.mxu0 0
    %204 = vmatpush1.bf16.msra.mxu0 0
    %205 = vmatprep.subr.bf16.mxu0 0
    %206 = vmatpush1.bf16.msra.mxu0 0
    %207 = vmatprep.subr.bf16.mxu0 0
    %208 = vmatpush1.bf16.msra.mxu0 0
    %209 = vmatprep.subr.bf16.mxu0 0
    %210 = vmatpush1.bf16.msra.mxu0 0
    %211 = vmatprep.subr.bf16.mxu0 0
    %212 = vmatpush1.bf16.msra.mxu0 0
    %213 = vmatprep.subr.bf16.mxu0 0
    %214 = vmatpush1.bf16.msra.mxu0 0
    %215 = vmatprep.mubr.bf16.mxu0 0
    %216 = vmatmul.mubr.bf16.gmra.mrb[0].mxu0 %v134
    %v217 = vpop.f32.mrb[0].mxu0
    %v218 = vadd.f32 0.0, %v217
    %v219 = vpop.f32.mrb[0].mxu0
    %v220 = vpop.f32.mrb[0].mxu0
    %v221 = vpop.f32.mrb[0].mxu0
    %222 = vdwg.mxu0
    %v224 = vlaneseq
    %v225 = vshrl.u32 %v224, 7
    %v226 = vsub.s32 0, %v225
    %v227 = vrot.slane %v76, %v226
    %v229 = vadd.f32 %v218, %v227
    %vm230 = vcmask 23552
    %231 = vst.msk [vmem:[%s5] sm:$0xff] %vm230, %v229
    // Predicated region
    $region34: #{tpu_custom_call.1} parent=1 // pred_check
      _
    $region35: #{tpu_custom_call.1} parent=1 // pred_check_branch
      %233 = sbr.rel (0) target = $region37
    $region36: #{tpu_custom_call.1} parent=1 // pred_region
      _
    $region37: #{tpu_custom_call.1} parent=1 // pred_fallthru
      _
    // Predicated region
    $region38: #{tpu_custom_call.1} parent=1 // pred_check
      _
    $region39: #{tpu_custom_call.1} parent=1 // pred_check_branch
      %235 = sbr.rel (0) target = $region41
    $region40: #{tpu_custom_call.1} parent=1 // pred_region
      _
    $region41: #{tpu_custom_call.1} parent=1 // pred_fallthru
      _
    %236 = vsyncpa [#allocation3], 1
    %237 = vsyncpa [#allocation5], 1

</llo_original>
